<compile_context>
chip_gen: v6e
topology: v6e:2x2x1
jax: 0.10.0
libtpu: 0.0.40
codegen_flags: <defaults>
</compile_context>

<pallas_src>
import functools

import jax
import jax.numpy as jnp
from jax.experimental import pallas as pl
from jax.experimental.pallas import tpu as pltpu


# ----------------------------------------------------------------------------
# helpers
# ----------------------------------------------------------------------------
def _layernorm(x, gamma, beta, eps=1e-5):
    mu = jnp.mean(x, axis=-1, keepdims=True)
    var = jnp.mean((x - mu) ** 2, axis=-1, keepdims=True)
    return (x - mu) * jax.lax.rsqrt(var + eps) * gamma + beta


def extract_patches(x, patch):
    # x: (B, C, H, W) -> (B, N, C*P*P); patch order (row, col), feat order (C, kh, kw)
    B, C, H, W = x.shape
    P = patch
    x = x.reshape(B, C, H // P, P, W // P, P)
    x = x.transpose(0, 2, 4, 1, 3, 5)
    return x.reshape(B, (H // P) * (W // P), C * P * P)


# ----------------------------------------------------------------------------
# kernel 1: patch embedding (whole batch in one step, M = B*N matmul)
# ----------------------------------------------------------------------------
def patch_embed_kernel(patches_ref, w_ref, b_ref, cls_ref, pos_ref, out_ref,
                       *, batch, n_patches):
    B, N = batch, n_patches
    S_pad = out_ref.shape[1]
    D = out_ref.shape[2]

    pe = jnp.dot(patches_ref[...], w_ref[...],
                 preferred_element_type=jnp.float32) + b_ref[...]        # (B*N, D) f32
    pe3 = pe.reshape(B, N, D) + pos_ref[1:1 + N, :][None, :, :]

    cls_row = cls_ref[...] + pos_ref[0:1, :]                             # (1, D)
    out_ref[:, 0:1, :] = jnp.broadcast_to(cls_row[None, :, :], (B, 1, D))
    out_ref[:, 1:1 + N, :] = pe3
    if S_pad > N + 1:  # zero the padded rows (static at trace time)
        out_ref[:, N + 1:, :] = jnp.zeros((B, S_pad - N - 1, D), jnp.float32)


def patch_embed(patches_flat, w, b, cls_tok, pos, batch, n_patches, s_pad):
    BN, K = patches_flat.shape
    D = w.shape[1]
    S = pos.shape[0]
    kern = functools.partial(patch_embed_kernel, batch=batch, n_patches=n_patches)
    return pl.pallas_call(
        kern,
        out_shape=jax.ShapeDtypeStruct((batch, s_pad, D), jnp.float32),
        grid=(1,),
        in_specs=[
            pl.BlockSpec((BN, K), lambda i: (0, 0)),
            pl.BlockSpec((K, D), lambda i: (0, 0)),
            pl.BlockSpec((1, D), lambda i: (0, 0)),
            pl.BlockSpec((1, D), lambda i: (0, 0)),
            pl.BlockSpec((S, D), lambda i: (0, 0)),
        ],
        out_specs=pl.BlockSpec((batch, s_pad, D), lambda i: (0, 0, 0)),
        compiler_params=pltpu.CompilerParams(dimension_semantics=("arbitrary",)),
    )(patches_flat, w, b, cls_tok, pos)


# ----------------------------------------------------------------------------
# kernel 2: fused transformer encoder STACK
#   grid = (batch_tiles, depth); per batch tile the (B_t*S_pad, D) residual stream
#   stays resident in the output VMEM block across the (arbitrary) layer axis;
#   per-layer weights are selected via the layer grid index (pipelined BlockSpecs).
# ----------------------------------------------------------------------------
def encoder_stack_kernel(x_ref, ln1g_ref, ln1b_ref, wqkv_ref, bqkv_ref,
                         wo_ref, bo_ref, ln2g_ref, ln2b_ref,
                         w1_ref, b1_ref, w2_ref, b2_ref, out_ref,
                         *, num_heads, batch_per_tile, seq_valid):
    layer = pl.program_id(1)

    @pl.when(layer == 0)
    def _init():
        out_ref[...] = x_ref[...]          # residual stream becomes VMEM-resident

    x = out_ref[...]                       # (M_t, D) f32
    M, D = x.shape
    B = batch_per_tile
    Sp = M // B
    H = num_heads
    hd = D // H
    scale = 1.0 / (hd ** 0.5)

    # ---------------- attention block ----------------
    xn = _layernorm(x, ln1g_ref[0], ln1b_ref[0]).astype(jnp.bfloat16)
    # fused QKV: one MXU pass with 3x the N dimension
    qkv = jnp.dot(xn, wqkv_ref[0], preferred_element_type=jnp.float32) + bqkv_ref[0]
    q3 = (qkv[:, 0:D] * scale).reshape(B, Sp, D).astype(jnp.bfloat16)
    k3 = qkv[:, D:2 * D].reshape(B, Sp, D).astype(jnp.bfloat16)
    v3 = qkv[:, 2 * D:3 * D].reshape(B, Sp, D).astype(jnp.bfloat16)

    # additive padded-key bias (0 for real keys, -1e30 for pad keys), (1, 1, Sp)
    key_idx = jax.lax.broadcasted_iota(jnp.int32, (1, 1, Sp), 2)
    key_bias = jnp.where(key_idx < seq_valid, 0.0, -1e30).astype(jnp.float32)

    # TODO(synk): heads still lane-sliced at hd offsets; a head-major relayout
    #             (single fused (B*H) batched dot_general) would remove the loop.
    ctx_heads = []
    for h in range(H):
        sl = slice(h * hd, (h + 1) * hd)
        qh = q3[:, :, sl]
        kh = k3[:, :, sl]
        vh = v3[:, :, sl]
        # scores: contract head_dim of both operands (no explicit transpose)
        s = jax.lax.dot_general(qh, kh, (((2,), (2,)), ((0,), (0,))),
                                preferred_element_type=jnp.float32)       # (B, Sp, Sp)
        s = s + key_bias
        m = jnp.max(s, axis=-1, keepdims=True)
        e = jnp.exp(s - m)
        p = e * pl.reciprocal(jnp.sum(e, axis=-1, keepdims=True), approx=True)
        ctx = jax.lax.dot_general(p.astype(jnp.bfloat16), vh,
                                  (((2,), (1,)), ((0,), (0,))),
                                  preferred_element_type=jnp.float32)     # (B, Sp, hd)
        ctx_heads.append(ctx.astype(jnp.bfloat16))

    # merge heads back into the lane dim, then ONE (M, D) @ (D, D) out-projection
    ctx_all = jnp.concatenate(ctx_heads, axis=-1).reshape(M, D)           # (M, D) bf16
    attn = jnp.dot(ctx_all, wo_ref[0], preferred_element_type=jnp.float32) + bo_ref[0]
    x = x + attn

    # ---------------- MLP block ----------------
    xn2 = _layernorm(x, ln2g_ref[0], ln2b_ref[0]).astype(jnp.bfloat16)
    h1 = jnp.dot(xn2, w1_ref[0], preferred_element_type=jnp.float32) + b1_ref[0]
    h1 = jax.nn.gelu(h1, approximate=False)          # erf-based, matches F.gelu
    h2 = jnp.dot(h1.astype(jnp.bfloat16), w2_ref[0],
                 preferred_element_type=jnp.float32) + b2_ref[0]
    out_ref[...] = x + h2


def encoder_stack(tokens2d, p, num_heads, batch, seq_valid, batch_tiles):
    M, D = tokens2d.shape
    L = p["wqkv"].shape[0]
    Hm = p["w1"].shape[2]
    if batch % batch_tiles != 0:
        batch_tiles = 1
    b_t = batch // batch_tiles
    m_t = M // batch_tiles
    kern = functools.partial(encoder_stack_kernel, num_heads=num_heads,
                             batch_per_tile=b_t, seq_valid=seq_valid)
    return pl.pallas_call(
        kern,
        out_shape=jax.ShapeDtypeStruct((M, D), jnp.float32),
        grid=(batch_tiles, L),
        in_specs=[
            pl.BlockSpec((m_t, D), lambda bt, l: (bt, 0)),        # tokens (per tile)
            pl.BlockSpec((1, 1, D), lambda bt, l: (l, 0, 0)),     # ln1 gamma
            pl.BlockSpec((1, 1, D), lambda bt, l: (l, 0, 0)),     # ln1 beta
            pl.BlockSpec((1, D, 3 * D), lambda bt, l: (l, 0, 0)),  # fused Wqkv
            pl.BlockSpec((1, 1, 3 * D), lambda bt, l: (l, 0, 0)),  # fused bqkv
            pl.BlockSpec((1, D, D), lambda bt, l: (l, 0, 0)),     # Wo (full D x D)
            pl.BlockSpec((1, 1, D), lambda bt, l: (l, 0, 0)),     # bo
            pl.BlockSpec((1, 1, D), lambda bt, l: (l, 0, 0)),     # ln2 gamma
            pl.BlockSpec((1, 1, D), lambda bt, l: (l, 0, 0)),     # ln2 beta
            pl.BlockSpec((1, D, Hm), lambda bt, l: (l, 0, 0)),    # W1
            pl.BlockSpec((1, 1, Hm), lambda bt, l: (l, 0, 0)),    # b1
            pl.BlockSpec((1, Hm, D), lambda bt, l: (l, 0, 0)),    # W2
            pl.BlockSpec((1, 1, D), lambda bt, l: (l, 0, 0)),     # b2
        ],
        out_specs=pl.BlockSpec((m_t, D), lambda bt, l: (bt, 0)),  # resident per tile
        input_output_aliases={0: 0},                              # reuse tokens HBM buf
        compiler_params=pltpu.CompilerParams(
            dimension_semantics=("parallel", "arbitrary"),        # tiles || , layers seq
            vmem_limit_bytes=48 * 1024 * 1024),                   # < v7x 64 MiB physical
    )(tokens2d, p["ln1_g"], p["ln1_b"], p["wqkv"], p["bqkv"], p["wo"], p["bo"],
      p["ln2_g"], p["ln2_b"], p["w1"], p["b1"], p["w2"], p["b2"])


# ----------------------------------------------------------------------------
# kernel 3: final LayerNorm on cls token + classification head (lane-dense output)
# ----------------------------------------------------------------------------
def head_kernel(cls_ref, ng_ref, nb_ref, wh_ref, bh_ref, out_ref):
    x = _layernorm(cls_ref[...], ng_ref[...], nb_ref[...])               # (B, D) f32
    out_ref[...] = jnp.dot(x.astype(jnp.bfloat16), wh_ref[...],
                           preferred_element_type=jnp.float32) + bh_ref[...]


def classify_head(cls_tokens, ng, nb, wh, bh, num_classes):
    B, D = cls_tokens.shape
    C = wh.shape[1]
    c_pad = ((C + 127) // 128) * 128                 # lane-dense output stores
    wh_p = jnp.pad(wh, ((0, 0), (0, c_pad - C)))
    bh_p = jnp.pad(bh, ((0, 0), (0, c_pad - C)))
    out = pl.pallas_call(
        head_kernel,
        out_shape=jax.ShapeDtypeStruct((B, c_pad), jnp.float32),
        grid=(1,),
        in_specs=[
            pl.BlockSpec((B, D), lambda i: (0, 0)),
            pl.BlockSpec((1, D), lambda i: (0, 0)),
            pl.BlockSpec((1, D), lambda i: (0, 0)),
            pl.BlockSpec((D, c_pad), lambda i: (0, 0)),
            pl.BlockSpec((1, c_pad), lambda i: (0, 0)),
        ],
        out_specs=pl.BlockSpec((B, c_pad), lambda i: (0, 0)),
        compiler_params=pltpu.CompilerParams(dimension_semantics=("arbitrary",)),
    )(cls_tokens, ng, nb, wh_p, bh_p)
    return out[:, :num_classes]


# ----------------------------------------------------------------------------
# parameters (deterministic, synthetic); matmul weights stored in bf16,
# per-layer tensors stacked along a leading layer axis for the fused kernel.
# ----------------------------------------------------------------------------
def init_params(key, image_size, patch_size, in_channels, num_classes,
                embed_dim, depth, num_heads, mlp_dim):
    K = in_channels * patch_size * patch_size
    N = (image_size // patch_size) ** 2
    S = N + 1
    D = embed_dim
    bf = jnp.bfloat16

    def nrm(k, shape, dtype=jnp.float32, scale=0.02):
        return (scale * jax.random.normal(k, shape)).astype(dtype)

    keys = jax.random.split(key, 12)
    params = {
        "w_patch": nrm(keys[0], (K, D), bf),
        "b_patch": nrm(keys[1], (1, D)),
        "cls": nrm(keys[2], (1, D)),
        "pos": nrm(keys[3], (S, D)),
        "ln_f_g": jnp.ones((1, D), jnp.float32),
        "ln_f_b": jnp.zeros((1, D), jnp.float32),
        "w_head": nrm(keys[4], (D, num_classes), bf),
        "b_head": nrm(keys[5], (1, num_classes)),
        # ---- stacked encoder layers ----
        "ln1_g": jnp.ones((depth, 1, D), jnp.float32),
        "ln1_b": jnp.zeros((depth, 1, D), jnp.float32),
        "wqkv": nrm(keys[6], (depth, D, 3 * D), bf),     # fused Wq|Wk|Wv
        "bqkv": nrm(keys[7], (depth, 1, 3 * D)),
        "wo": nrm(keys[8], (depth, D, D), bf),           # full (D, D) out-proj
        "bo": nrm(keys[9], (depth, 1, D)),
        "ln2_g": jnp.ones((depth, 1, D), jnp.float32),
        "ln2_b": jnp.zeros((depth, 1, D), jnp.float32),
        "w1": nrm(keys[10], (depth, D, mlp_dim), bf),
        "b1": jnp.zeros((depth, 1, mlp_dim), jnp.float32),
        "w2": nrm(keys[11], (depth, mlp_dim, D), bf),
        "b2": jnp.zeros((depth, 1, D), jnp.float32),
    }
    return params


# ----------------------------------------------------------------------------
# full forward pass
# ----------------------------------------------------------------------------
def vit_forward(x, params, patch_size, num_heads, batch_tiles=None):
    B = x.shape[0]
    patches = extract_patches(x, patch_size)                 # (B, N, K) plain-JAX glue
    _, N, K = patches.shape
    D = params["w_patch"].shape[1]
    S = N + 1
    S_pad = ((S + 15) // 16) * 16                            # bf16-packing aligned seq

    patches_flat = patches.reshape(B * N, K).astype(jnp.bfloat16)   # halve DMA bytes
    tokens = patch_embed(patches_flat, params["w_patch"], params["b_patch"],
                         params["cls"], params["pos"], B, N, S_pad)   # (B, S_pad, D)

    tokens2d = tokens.reshape(B * S_pad, D)                  # flatten (B, S) -> matmul M
    if batch_tiles is None:
        batch_tiles = 2 if B % 2 == 0 else 1                 # use both TCs on v7x
    tokens2d = encoder_stack(tokens2d, params, num_heads, B, seq_valid=S,
                             batch_tiles=batch_tiles)

    cls_tok = tokens2d.reshape(B, S_pad, D)[:, 0, :]         # plain-JAX glue
    num_classes = params["b_head"].shape[1]
    return classify_head(cls_tok, params["ln_f_g"], params["ln_f_b"],
                         params["w_head"], params["b_head"], num_classes)


# ----------------------------------------------------------------------------
# main
# ----------------------------------------------------------------------------
if __name__ == "__main__":
    image_size = 16
    patch_size = 4
    in_channels = 3
    num_classes = 10
    embed_dim = 32
    depth = 2
    num_heads = 4
    mlp_dim = 64
    batch = 2

    key = jax.random.PRNGKey(0)
    k_x, k_p = jax.random.split(key)
    x = jax.random.normal(k_x, (batch, in_channels, image_size, image_size),
                          dtype=jnp.float32)
    params = init_params(k_p, image_size, patch_size, in_channels, num_classes,
                         embed_dim, depth, num_heads, mlp_dim)

    logits = vit_forward(x, params, patch_size, num_heads)
    jax.block_until_ready(logits)
    assert logits.shape == (batch, num_classes)
    assert bool(jnp.all(jnp.isfinite(logits)))
    print("KERNEL_OK")
</pallas_src>

<mosaic_0001>
module attributes {stable_mosaic.version = 11 : i64} {
  func.func @patch_embed_kernel(%arg0: i32, %arg1: memref<32x48xbf16, #tpu.memory_space<vmem>>, %arg2: memref<48x32xbf16, #tpu.memory_space<vmem>>, %arg3: memref<1x32xf32, #tpu.memory_space<vmem>>, %arg4: memref<1x32xf32, #tpu.memory_space<vmem>>, %arg5: memref<17x32xf32, #tpu.memory_space<vmem>>, %arg6: memref<2x32x32xf32, #tpu.memory_space<vmem>>) attributes {dimension_semantics = [#tpu.dimension_semantics<arbitrary>], iteration_bounds = array<i64: 1>, scalar_prefetch = 0 : i64, scratch_operands = 0 : i64, tpu.core_type = #tpu.core_type<tc>, window_params = [{pipeline_mode = #tpu.pipeline_mode<synchronous>, transform_indices = @transform_0, window_bounds = array<i64: 32, 48>}, {pipeline_mode = #tpu.pipeline_mode<synchronous>, transform_indices = @transform_1, window_bounds = array<i64: 48, 32>}, {pipeline_mode = #tpu.pipeline_mode<synchronous>, transform_indices = @transform_2, window_bounds = array<i64: 1, 32>}, {pipeline_mode = #tpu.pipeline_mode<synchronous>, transform_indices = @transform_3, window_bounds = array<i64: 1, 32>}, {pipeline_mode = #tpu.pipeline_mode<synchronous>, transform_indices = @transform_4, window_bounds = array<i64: 17, 32>}, {pipeline_mode = #tpu.pipeline_mode<synchronous>, transform_indices = @transform_5, window_bounds = array<i64: 2, 32, 32>}]} {
    %c0 = arith.constant 0 : index
    %c0_0 = arith.constant 0 : index
    %0 = vector.load %arg1[%c0, %c0_0] : memref<32x48xbf16, #tpu.memory_space<vmem>>, vector<32x48xbf16>
    %c0_1 = arith.constant 0 : index
    %c0_2 = arith.constant 0 : index
    %1 = vector.load %arg2[%c0_1, %c0_2] : memref<48x32xbf16, #tpu.memory_space<vmem>>, vector<48x32xbf16>
    %cst = arith.constant dense<0.000000e+00> : vector<32x32xf32>
    %2 = tpu.matmul %0, %1, %cst {dimension_numbers = #tpu.dot_dimension_numbers<[1], [0], [0], [1], [0, 0, 1, 1], [], []>} : vector<32x48xbf16>, vector<48x32xbf16>, vector<32x32xf32> -> vector<32x32xf32>
    %c0_3 = arith.constant 0 : index
    %c0_4 = arith.constant 0 : index
    %3 = vector.load %arg3[%c0_3, %c0_4] : memref<1x32xf32, #tpu.memory_space<vmem>>, vector<1x32xf32>
    %4 = vector.broadcast %3 : vector<1x32xf32> to vector<32x32xf32>
    %5 = arith.addf %2, %4 : vector<32x32xf32>
    %6 = vector.shape_cast %5 : vector<32x32xf32> to vector<2x16x32xf32>
    %c1 = arith.constant 1 : index
    %c0_5 = arith.constant 0 : index
    %7 = vector.load %arg5[%c1, %c0_5] : memref<17x32xf32, #tpu.memory_space<vmem>>, vector<16x32xf32>
    %8 = vector.shape_cast %7 : vector<16x32xf32> to vector<1x16x32xf32>
    %9 = vector.broadcast %8 : vector<1x16x32xf32> to vector<2x16x32xf32>
    %10 = arith.addf %6, %9 : vector<2x16x32xf32>
    %c0_6 = arith.constant 0 : index
    %c0_7 = arith.constant 0 : index
    %11 = vector.load %arg4[%c0_6, %c0_7] : memref<1x32xf32, #tpu.memory_space<vmem>>, vector<1x32xf32>
    %c0_8 = arith.constant 0 : index
    %c0_9 = arith.constant 0 : index
    %12 = vector.load %arg5[%c0_8, %c0_9] : memref<17x32xf32, #tpu.memory_space<vmem>>, vector<1x32xf32>
    %13 = arith.addf %11, %12 : vector<1x32xf32>
    %14 = vector.shape_cast %13 : vector<1x32xf32> to vector<1x1x32xf32>
    %15 = vector.shape_cast %14 : vector<1x1x32xf32> to vector<1x1x32xf32>
    %16 = vector.broadcast %15 : vector<1x1x32xf32> to vector<2x1x32xf32>
    %c0_10 = arith.constant 0 : index
    %c0_11 = arith.constant 0 : index
    %c0_12 = arith.constant 0 : index
    %17 = vector.load %arg6[%c0_10, %c0_11, %c0_12] : memref<2x32x32xf32, #tpu.memory_space<vmem>>, vector<2x1x32xf32>
    tpu.vector_store %arg6[%c0_10, %c0_11, %c0_12], %16 {strides = array<i32>} : memref<2x32x32xf32, #tpu.memory_space<vmem>>, vector<2x1x32xf32>,
    %c0_13 = arith.constant 0 : index
    %c1_14 = arith.constant 1 : index
    %c0_15 = arith.constant 0 : index
    %18 = vector.load %arg6[%c0_13, %c1_14, %c0_15] : memref<2x32x32xf32, #tpu.memory_space<vmem>>, vector<2x16x32xf32>
    tpu.vector_store %arg6[%c0_13, %c1_14, %c0_15], %10 {strides = array<i32>} : memref<2x32x32xf32, #tpu.memory_space<vmem>>, vector<2x16x32xf32>,
    %cst_16 = arith.constant 0.000000e+00 : f32
    %19 = vector.broadcast %cst_16 : f32 to vector<2x15x32xf32>
    %c0_17 = arith.constant 0 : index
    %c17 = arith.constant 17 : index
    %c0_18 = arith.constant 0 : index
    %20 = vector.load %arg6[%c0_17, %c17, %c0_18] : memref<2x32x32xf32, #tpu.memory_space<vmem>>, vector<2x15x32xf32>
    tpu.vector_store %arg6[%c0_17, %c17, %c0_18], %19 {strides = array<i32>} : memref<2x32x32xf32, #tpu.memory_space<vmem>>, vector<2x15x32xf32>,
    return
  }
  func.func @transform_0(%arg0: i32) -> (i32, i32) {
    %c0_i32 = arith.constant 0 : i32
    %c0_i32_0 = arith.constant 0 : i32
    %c0_i32_1 = arith.constant 0 : i32
    return %c0_i32, %c0_i32_0 : i32, i32
  }
  func.func @transform_1(%arg0: i32) -> (i32, i32) {
    %c0_i32 = arith.constant 0 : i32
    %c0_i32_0 = arith.constant 0 : i32
    %c0_i32_1 = arith.constant 0 : i32
    return %c0_i32, %c0_i32_0 : i32, i32
  }
  func.func @transform_2(%arg0: i32) -> (i32, i32) {
    %c0_i32 = arith.constant 0 : i32
    %c0_i32_0 = arith.constant 0 : i32
    %c0_i32_1 = arith.constant 0 : i32
    return %c0_i32, %c0_i32_0 : i32, i32
  }
  func.func @transform_3(%arg0: i32) -> (i32, i32) {
    %c0_i32 = arith.constant 0 : i32
    %c0_i32_0 = arith.constant 0 : i32
    %c0_i32_1 = arith.constant 0 : i32
    return %c0_i32, %c0_i32_0 : i32, i32
  }
  func.func @transform_4(%arg0: i32) -> (i32, i32) {
    %c0_i32 = arith.constant 0 : i32
    %c0_i32_0 = arith.constant 0 : i32
    %c0_i32_1 = arith.constant 0 : i32
    return %c0_i32, %c0_i32_0 : i32, i32
  }
  func.func @transform_5(%arg0: i32) -> (i32, i32, i32) {
    %c0_i32 = arith.constant 0 : i32
    %c0_i32_0 = arith.constant 0 : i32
    %c0_i32_1 = arith.constant 0 : i32
    %c0_i32_2 = arith.constant 0 : i32
    return %c0_i32, %c0_i32_0, %c0_i32_1 : i32, i32, i32
  }
}

</mosaic_0001>

<llo_original>
// kernel: tpu_custom_call.1
$region0: #{tpu_custom_call.1}
  #allocation0 [shape = 'u32[]', space=smem, size = 0x4, offset = 0x4, fixed_abs, tag = 'smem constant byte address 0x4 - core index']
  #allocation1 [shape = 'u32[144,128]{1,0:T(1,128)}', space=vmem, size = 0x12000, scoped, tag = 'internal scratch']
  %s0 = inlined_call_operand.vmem [shape: bf16[32,48], index: 0, kind: input, shape index: {}]
  %s1 = inlined_call_operand.vmem [shape: bf16[48,32], index: 1, kind: input, shape index: {}]
  %s2 = inlined_call_operand.vmem [shape: f32[1,32], index: 2, kind: input, shape index: {}]
  %s3 = inlined_call_operand.vmem [shape: f32[1,32], index: 3, kind: input, shape index: {}]
  %s4 = inlined_call_operand.vmem [shape: f32[17,32], index: 4, kind: input, shape index: {}]
  %s5 = inlined_call_operand.hbm [shape: f32[2,32,32], index: 5, kind: output, shape index: {}]
  %s6 = sld [smem:[#allocation0]]
  $region30: #{tpu_custom_call.1} parent=0
    _
  %s8 = ssub.s32 1, %s6
  %s9 = scalar_select 0, %s8, %s6
  $region1: #{tpu_custom_call.1} parent=0
    #allocation2 [shape = 'u8[32768]{0}', space=vmem, size = 0x8000, scoped, tag = 'output window, operand 0, single buffered']
    #allocation3 [shape = 's32[1]{0}', space=sflag, size = 0x4, scoped, tag = 'scoped memory for tpu_custom_call.1']
    %10 = vsyncpa [#allocation3], 0
    // Predicated region
    $region2: #{tpu_custom_call.1} parent=1 // pred_check
      _
    $region3: #{tpu_custom_call.1} parent=1 // pred_check_branch
      %12 = sbr.rel (0) target = $region5
    $region4: #{tpu_custom_call.1} parent=1 // pred_region
      _
    $region5: #{tpu_custom_call.1} parent=1 // pred_fallthru
      _
    // Predicated region
    $region6: #{tpu_custom_call.1} parent=1 // pred_check
      _
    $region7: #{tpu_custom_call.1} parent=1 // pred_check_branch
      %14 = sbr.rel (0) target = $region9
    $region8: #{tpu_custom_call.1} parent=1 // pred_region
      _
    $region9: #{tpu_custom_call.1} parent=1 // pred_fallthru
      _
    // Predicated region
    $region10: #{tpu_custom_call.1} parent=1 // pred_check
      _
    $region11: #{tpu_custom_call.1} parent=1 // pred_check_branch
      %16 = sbr.rel (0) target = $region13
    $region12: #{tpu_custom_call.1} parent=1 // pred_region
      _
    $region13: #{tpu_custom_call.1} parent=1 // pred_fallthru
      _
    // Predicated region
    $region14: #{tpu_custom_call.1} parent=1 // pred_check
      _
    $region15: #{tpu_custom_call.1} parent=1 // pred_check_branch
      %18 = sbr.rel (0) target = $region17
    $region16: #{tpu_custom_call.1} parent=1 // pred_region
      _
    $region17: #{tpu_custom_call.1} parent=1 // pred_fallthru
      _
    // Predicated region
    $region18: #{tpu_custom_call.1} parent=1 // pred_check
      _
    $region19: #{tpu_custom_call.1} parent=1 // pred_check_branch
      %20 = sbr.rel (0) target = $region21
    $region20: #{tpu_custom_call.1} parent=1 // pred_region
      _
    $region21: #{tpu_custom_call.1} parent=1 // pred_fallthru
      _
    %v22 = vld [vmem:[%s0] sm:$0xf]
    %v23 = vld [vmem:[%s0 + $0x4] sm:$0xf]
    %v24 = vld [vmem:[%s0 + $0x8] sm:$0xf]
    %v25 = vld [vmem:[%s0 + $0xc] sm:$0xf]
    %v26 = vld [vmem:[%s1] sm:$0xf]
    %v27 = vld [vmem:[%s1 + $0x4] sm:$0xf]
    %v28 = vld [vmem:[%s1 + $0x8] sm:$0xf]
    %v29 = vld [vmem:[%s1 + $0xc] sm:$0xf]
    %v30 = vld [vmem:[%s1 + $0x10] sm:$0xf]
    %v31 = vld [vmem:[%s1 + $0x14] sm:$0xf]
    %v32 = vld [vmem:[%s2] sm:$0x1]
    %v34 = vlaneseq
    %v35 = vshrl.u32 %v34, 7
    %v36 = vsub.s32 0, %v35
    %v37 = vrot.slane %v32, %v36
    %v43 = vunpack.c.l.b16 %v22
    %v44 = vunpack.c.l.b16 %v23
    %v45 = vunpack.c.l.b16 %v24
    %v46 = vunpack.c.l.b16 %v25
    %v47 = vpack.c.b16 %v44, %v43
    %v48 = vpack.c.b16 %v46, %v45
    %v55 = vunpack.c.l.b16 %v26
    %v56 = vunpack.c.l.b16 %v27
    %v57 = vunpack.c.l.b16 %v28
    %v58 = vunpack.c.l.b16 %v29
    %v59 = vunpack.c.l.b16 %v30
    %v60 = vunpack.c.l.b16 %v31
    %v61 = vpack.c.b16 %v56, %v55
    %v62 = vpack.c.b16 %v58, %v57
    %v63 = vpack.c.b16 %v60, %v59
    %vm67 = vcmask 392192
    %v69 = vsel %vm67, %v47, 0
    %v72 = vsel %vm67, %v48, 0
    %74 = vmatprep.subr.bf16.mxu0 0
    %75 = vmatpush1.bf16.msra.mxu0 0
    %76 = vmatprep.subr.bf16.mxu0 0
    %77 = vmatpush1.bf16.msra.mxu0 0
    %78 = vmatprep.subr.bf16.mxu0 0
    %79 = vmatpush1.bf16.msra.mxu0 0
    %80 = vmatprep.subr.bf16.mxu0 0
    %81 = vmatpush1.bf16.msra.mxu0 0
    %82 = vmatprep.subr.bf16.mxu0 0
    %83 = vmatpush1.bf16.msra.mxu0 0
    %84 = vmatprep.subr.bf16.mxu0 0
    %85 = vmatpush1.bf16.msra.mxu0 %v63
    %86 = vmatprep.subr.bf16.mxu0 0
    %87 = vmatpush1.bf16.msra.mxu0 %v62
    %88 = vmatprep.subr.bf16.mxu0 0
    %89 = vmatpush1.bf16.msra.mxu0 %v61
    %90 = vmatprep.subr.bf16.mxu0 0
    %91 = vmatpush2.bf16.msra.mxu0 0
    %92 = vmatprep.subr.bf16.mxu0 0
    %93 = vmatpush2.bf16.msra.mxu0 0
    %94 = vmatprep.subr.bf16.mxu0 0
    %95 = vmatpush2.bf16.msra.mxu0 0
    %96 = vmatprep.subr.bf16.mxu0 0
    %97 = vmatpush2.bf16.msra.mxu0 0
    %98 = vmatprep.subr.bf16.mxu0 0
    %99 = vmatpush2.bf16.msra.mxu0 0
    %100 = vmatprep.subr.bf16.mxu0 0
    %101 = vmatpush2.bf16.msra.mxu0 0
    %102 = vmatprep.subr.bf16.mxu0 0
    %103 = vmatpush2.bf16.msra.mxu0 0
    %104 = vmatprep.subr.bf16.mxu0 0
    %105 = vmatpush2.bf16.msra.mxu0 0
    %106 = vmatprep.mubr.bf16.mxu0 0
    %107 = vmatmul.mubr.bf16.gmra.mxu0 %v69
    %v108 = vpop.f32.mrf.mxu0
    %v109 = vadd.f32 %v37, %v108
    %v110 = vpop.f32.mrf.mxu0
    %v111 = vpop.f32.mrf.mxu0
    %v112 = vadd.f32 %v37, %v111
    %v113 = vpop.f32.mrf.mxu0
    %114 = vmatprep.mubr.bf16.mxu0 0
    %115 = vmatmul.mubr.bf16.gmra.mxu0 %v72
    %v116 = vpop.f32.mrf.mxu0
    %v117 = vadd.f32 %v37, %v116
    %v118 = vpop.f32.mrf.mxu0
    %v119 = vpop.f32.mrf.mxu0
    %v120 = vadd.f32 %v37, %v119
    %v121 = vpop.f32.mrf.mxu0
    %122 = vdwg.mxu0
    %v123 = vld [vmem:[%s4 + $0x1] sm:$0xff]
    %v124 = vld [vmem:[%s4 + $0x9] sm:$0xff]
    %v125 = vadd.f32 %v109, %v123
    %v126 = vadd.f32 %v112, %v124
    %v127 = vadd.f32 %v117, %v123
    %v128 = vadd.f32 %v120, %v124
    %v129 = vld [vmem:[%s3] sm:$0x1]
    %v130 = vld [vmem:[%s4] sm:$0x1]
    %v131 = vadd.f32 %v129, %v130
    %vm132 = vcmask 253952
    %133 = vst.msk [vmem:[#allocation2] sm:$0x1] %vm132, %v131
    %134 = vst.msk [vmem:[#allocation2 + $0x20] sm:$0x1] %vm132, %v131
    %vm135 = vcmask 261120
    %136 = vst.msk [vmem:[#allocation2 + $0x1] sm:$0xff] %vm135, %v125
    %137 = vst.msk [vmem:[#allocation2 + $0x9] sm:$0xff] %vm135, %v126
    %138 = vst.msk [vmem:[#allocation2 + $0x21] sm:$0xff] %vm135, %v127
    %139 = vst.msk [vmem:[#allocation2 + $0x29] sm:$0xff] %vm135, %v128
    %140 = vst.msk [vmem:[#allocation2 + $0x11] sm:$0xff] %vm135, 0.0
    %vm141 = vcmask 260096
    %142 = vst.msk [vmem:[#allocation2 + $0x19] sm:$0x7f] %vm141, 0.0
    %143 = vst.msk [vmem:[#allocation2 + $0x31] sm:$0xff] %vm135, 0.0
    %144 = vst.msk [vmem:[#allocation2 + $0x39] sm:$0x7f] %vm141, 0.0
    // Predicated region
    $region22: #{tpu_custom_call.1} parent=1 // pred_check
      _
    $region23: #{tpu_custom_call.1} parent=1 // pred_check_branch
      %146 = sbr.rel (0) target = $region25
    $region24: #{tpu_custom_call.1} parent=1 // pred_region
      %s148 = ssub.s32 1024, 1024
      %149 = vsyncadd [#allocation3], %s148
      %s150 = sshll.u32 [#allocation2], 4
      %s151 = int_to_ptr.vmem [resolvable:$true] %s150
      %156 = dma.vmem_to_hbm [thread:$0]  %s151, 1024, %s5, [#allocation3], 128, 128, 8
    $region25: #{tpu_custom_call.1} parent=1 // pred_fallthru
      _
    // Predicated region
    $region26: #{tpu_custom_call.1} parent=1 // pred_check
      _
    $region27: #{tpu_custom_call.1} parent=1 // pred_check_branch
      %158 = sbr.rel (0) target = $region29
    $region28: #{tpu_custom_call.1} parent=1 // pred_region
      %159 = dma.done [#allocation3], 1024
    $region29: #{tpu_custom_call.1} parent=1 // pred_fallthru
      _
    %160 = vsyncpa [#allocation3], 1

</llo_original>
